<compile_context>
chip_gen: v7x
topology: tpu7x:2x2x1
jax: 0.10.0
libtpu: 0.0.40
codegen_flags: <defaults>
</compile_context>

<pallas_src>
import jax
import jax.numpy as jnp
from jax.experimental import pallas as pl
from jax.experimental.pallas import tpu as pltpu  # noqa: F401  (TPU backend)

EPS = 1e-5


def _bn_kernel(x_ref, gamma_ref, beta_ref, o_ref):
    # x_ref: (N, C, L) f32, L = H*W ; gamma/beta: (1, C, 1) f32
    x = x_ref[...]
    n_elems = x.shape[0] * x.shape[2]
    inv_n = jnp.float32(1.0 / n_elems)

    # One-pass statistics: per-channel sum and sum-of-squares (lane reductions).
    s = jnp.sum(jnp.sum(x, axis=2, keepdims=True), axis=0, keepdims=True)      # (1, C, 1)
    ss = jnp.sum(jnp.sum(x * x, axis=2, keepdims=True), axis=0, keepdims=True)  # (1, C, 1)

    mean = s * inv_n
    var = ss * inv_n - mean * mean          # biased variance (training-mode BN)

    # Fold normalization + affine into a single per-channel scale/shift.
    scale = jax.lax.rsqrt(var + EPS) * gamma_ref[...]   # (1, C, 1)
    shift = beta_ref[...] - mean * scale                # (1, C, 1)

    # Single broadcasted elementwise pass.
    o_ref[...] = (x * scale + shift).astype(o_ref.dtype)


def batchnorm2d(x_nchw, gamma, beta):
    """x_nchw: (N, C, H, W) float32; gamma, beta: (C,) float32."""
    N, C, H, W = x_nchw.shape
    L = H * W

    # Metadata-only reshape (no transpose, no extra HBM copy).
    x3d = x_nchw.reshape(N, C, L)
    g = gamma.reshape(1, C, 1).astype(jnp.float32)
    b = beta.reshape(1, C, 1).astype(jnp.float32)

    # TODO(synk): for large N*H*W (realistic training shapes) tile L with a
    # grid axis + (1,C,1) VMEM accumulator instead of one full-array block.
    out3d = pl.pallas_call(
        _bn_kernel,
        out_shape=jax.ShapeDtypeStruct((N, C, L), x_nchw.dtype),
        in_specs=[
            pl.BlockSpec((N, C, L), lambda: (0, 0, 0)),
            pl.BlockSpec((1, C, 1), lambda: (0, 0, 0)),
            pl.BlockSpec((1, C, 1), lambda: (0, 0, 0)),
        ],
        out_specs=pl.BlockSpec((N, C, L), lambda: (0, 0, 0)),
        cost_estimate=pl.CostEstimate(
            flops=5 * N * C * L,
            transcendentals=C,
            bytes_accessed=2 * N * C * L * 4,
        ),
    )(x3d, g, b)

    return out3d.reshape(N, C, H, W)


if __name__ == "__main__":
    key = jax.random.PRNGKey(0)
    # Shape consistent with the module: x71 ~ [1, 40, 28, 28]
    N, C, H, W = 1, 40, 28, 28
    x = jax.random.normal(key, (N, C, H, W), dtype=jnp.float32)

    # PyTorch BatchNorm2d default affine init: weight = 1, bias = 0
    gamma = jnp.ones((C,), dtype=jnp.float32)
    beta = jnp.zeros((C,), dtype=jnp.float32)

    y = batchnorm2d(x, gamma, beta)
    y = jax.block_until_ready(y)

    # Reference check (pure JAX, training-mode batch-norm semantics)
    mean = jnp.mean(x, axis=(0, 2, 3), keepdims=True)
    var = jnp.mean((x - mean) ** 2, axis=(0, 2, 3), keepdims=True)
    y_ref = (x - mean) / jnp.sqrt(var + EPS) * gamma.reshape(1, C, 1, 1) + beta.reshape(1, C, 1, 1)
    assert jnp.allclose(y, y_ref, atol=1e-4, rtol=1e-4), "mismatch vs reference"

    print("KERNEL_OK")
</pallas_src>

<mosaic_0001>
module attributes {stable_mosaic.version = 11 : i64} {
  func.func @_bn_kernel(%arg0: memref<1x40x784xf32, #tpu.memory_space<vmem>>, %arg1: memref<1x40x1xf32, #tpu.memory_space<vmem>>, %arg2: memref<1x40x1xf32, #tpu.memory_space<vmem>>, %arg3: memref<1x40x784xf32, #tpu.memory_space<vmem>>) attributes {dimension_semantics = [], scalar_prefetch = 0 : i64, scratch_operands = 0 : i64, tpu.core_type = #tpu.core_type<tc>} {
    %c0 = arith.constant 0 : index
    %c0_0 = arith.constant 0 : index
    %c0_1 = arith.constant 0 : index
    %0 = vector.load %arg0[%c0, %c0_0, %c0_1] : memref<1x40x784xf32, #tpu.memory_space<vmem>>, vector<1x40x784xf32>
    %cst = arith.constant dense<0.000000e+00> : vector<1x40xf32>
    %1 = vector.multi_reduction <add>, %0, %cst [2] : vector<1x40x784xf32> to vector<1x40xf32>
    %2 = vector.shape_cast %1 : vector<1x40xf32> to vector<1x40x1xf32>
    %cst_2 = arith.constant dense<0.000000e+00> : vector<40x1xf32>
    %3 = vector.multi_reduction <add>, %2, %cst_2 [0] : vector<1x40x1xf32> to vector<40x1xf32>
    %4 = vector.shape_cast %3 : vector<40x1xf32> to vector<1x40x1xf32>
    %5 = arith.mulf %0, %0 : vector<1x40x784xf32>
    %cst_3 = arith.constant dense<0.000000e+00> : vector<1x40xf32>
    %6 = vector.multi_reduction <add>, %5, %cst_3 [2] : vector<1x40x784xf32> to vector<1x40xf32>
    %7 = vector.shape_cast %6 : vector<1x40xf32> to vector<1x40x1xf32>
    %cst_4 = arith.constant dense<0.000000e+00> : vector<40x1xf32>
    %8 = vector.multi_reduction <add>, %7, %cst_4 [0] : vector<1x40x1xf32> to vector<40x1xf32>
    %9 = vector.shape_cast %8 : vector<40x1xf32> to vector<1x40x1xf32>
    %cst_5 = arith.constant 0.00127551018 : f32
    %10 = vector.broadcast %cst_5 : f32 to vector<1x40x1xf32>
    %11 = arith.mulf %4, %10 : vector<1x40x1xf32>
    %cst_6 = arith.constant 0.00127551018 : f32
    %12 = vector.broadcast %cst_6 : f32 to vector<1x40x1xf32>
    %13 = arith.mulf %9, %12 : vector<1x40x1xf32>
    %14 = arith.mulf %11, %11 : vector<1x40x1xf32>
    %15 = arith.subf %13, %14 : vector<1x40x1xf32>
    %cst_7 = arith.constant 9.99999974E-6 : f32
    %16 = vector.broadcast %cst_7 : f32 to vector<1x40x1xf32>
    %17 = arith.addf %15, %16 : vector<1x40x1xf32>
    %18 = math.rsqrt %17 : vector<1x40x1xf32>
    %c0_8 = arith.constant 0 : index
    %c0_9 = arith.constant 0 : index
    %c0_10 = arith.constant 0 : index
    %19 = vector.load %arg1[%c0_8, %c0_9, %c0_10] : memref<1x40x1xf32, #tpu.memory_space<vmem>>, vector<1x40x1xf32>
    %20 = arith.mulf %18, %19 : vector<1x40x1xf32>
    %c0_11 = arith.constant 0 : index
    %c0_12 = arith.constant 0 : index
    %c0_13 = arith.constant 0 : index
    %21 = vector.load %arg2[%c0_11, %c0_12, %c0_13] : memref<1x40x1xf32, #tpu.memory_space<vmem>>, vector<1x40x1xf32>
    %22 = arith.mulf %11, %20 : vector<1x40x1xf32>
    %23 = arith.subf %21, %22 : vector<1x40x1xf32>
    %24 = vector.broadcast %20 : vector<1x40x1xf32> to vector<1x40x784xf32>
    %25 = arith.mulf %0, %24 : vector<1x40x784xf32>
    %26 = vector.broadcast %23 : vector<1x40x1xf32> to vector<1x40x784xf32>
    %27 = arith.addf %25, %26 : vector<1x40x784xf32>
    %c0_14 = arith.constant 0 : index
    %c0_15 = arith.constant 0 : index
    %c0_16 = arith.constant 0 : index
    %28 = vector.load %arg3[%c0_14, %c0_15, %c0_16] : memref<1x40x784xf32, #tpu.memory_space<vmem>>, vector<1x40x784xf32>
    tpu.vector_store %arg3[%c0_14, %c0_15, %c0_16], %27 {strides = array<i32>} : memref<1x40x784xf32, #tpu.memory_space<vmem>>, vector<1x40x784xf32>,
    return
  }
}

</mosaic_0001>

<llo_original>
// kernel: tpu_custom_call.1
$region0: #{tpu_custom_call.1}
  #allocation0 [shape = 'u32[]', space=smem, size = 0x4, offset = 0x4, fixed_abs, tag = 'smem constant byte address 0x4 - core index']
  #allocation1 [shape = 'u32[144,128]{1,0:T(1,128)}', space=vmem, size = 0x12000, scoped, tag = 'internal scratch']
  %s0 = inlined_call_operand.hbm [shape: f32[1,40,784], index: 0, kind: input, shape index: {}]
  %s1 = inlined_call_operand.vmem [shape: f32[1,40,1], index: 1, kind: input, shape index: {}]
  %s2 = inlined_call_operand.vmem [shape: f32[1,40,1], index: 2, kind: input, shape index: {}]
  %s3 = inlined_call_operand.hbm [shape: f32[1,40,784], index: 3, kind: output, shape index: {}]
  %s4 = sld [smem:[#allocation0]]
  $region26: #{tpu_custom_call.1} parent=0
    _
  %s6 = ssub.s32 1, %s4
  %s7 = scalar_select 0, %s6, %s4
  $region1: #{tpu_custom_call.1} parent=0
    #allocation2 [shape = 'u8[143360]{0}', space=vmem, size = 0x23000, scoped, tag = 'input window, operand 0, single buffered']
    #allocation3 [shape = 's32[1]{0}', space=sflag, size = 0x4, scoped, tag = 'scoped memory for tpu_custom_call.1']
    #allocation4 [shape = 's32[1]{0}', space=sflag, size = 0x4, scoped, tag = 'scoped memory for tpu_custom_call.1']
    #allocation5 [shape = 'u8[143360]{0}', space=vmem, size = 0x23000, scoped, tag = 'output window, operand 0, single buffered']
    %8 = vsyncpa [#allocation3], 0
    %9 = vsyncpa [#allocation4], 0
    // Predicated region
    $region2: #{tpu_custom_call.1} parent=1 // pred_check
      _
    $region3: #{tpu_custom_call.1} parent=1 // pred_check_branch
      %11 = sbr.rel (0) target = $region5
    $region4: #{tpu_custom_call.1} parent=1 // pred_region
      %s13 = ssub.s32 4480, 4480
      %14 = vsyncadd [#allocation3], %s13
      %s15 = sshll.u32 [#allocation2], 4
      %s16 = int_to_ptr.vmem [resolvable:$true] %s15
      %21 = dma.hbm_to_vmem [thread:$0]  %s0, 4480, %s16, [#allocation3], 896, 896, 56
    $region5: #{tpu_custom_call.1} parent=1 // pred_fallthru
      _
    // Predicated region
    $region6: #{tpu_custom_call.1} parent=1 // pred_check
      _
    $region7: #{tpu_custom_call.1} parent=1 // pred_check_branch
      %23 = sbr.rel (0) target = $region9
    $region8: #{tpu_custom_call.1} parent=1 // pred_region
      _
    $region9: #{tpu_custom_call.1} parent=1 // pred_fallthru
      _
    // Predicated region
    $region10: #{tpu_custom_call.1} parent=1 // pred_check
      _
    $region11: #{tpu_custom_call.1} parent=1 // pred_check_branch
      %25 = sbr.rel (0) target = $region13
    $region12: #{tpu_custom_call.1} parent=1 // pred_region
      _
    $region13: #{tpu_custom_call.1} parent=1 // pred_fallthru
      _
    // Predicated region
    $region14: #{tpu_custom_call.1} parent=1 // pred_check
      _
    $region15: #{tpu_custom_call.1} parent=1 // pred_check_branch
      %27 = sbr.rel (0) target = $region17
    $region16: #{tpu_custom_call.1} parent=1 // pred_region
      %28 = dma.done [#allocation3], 4480
    $region17: #{tpu_custom_call.1} parent=1 // pred_fallthru
      _
    %v29 = vld [vmem:[#allocation2] sm:$0xff]
    %v30 = vld [vmem:[#allocation2 + $0x8] sm:$0xff]
    %v31 = vld [vmem:[#allocation2 + $0x10] sm:$0xff]
    %v32 = vld [vmem:[#allocation2 + $0x18] sm:$0xff]
    %v33 = vld [vmem:[#allocation2 + $0x20] sm:$0xff]
    %v34 = vld [vmem:[#allocation2 + $0x28] sm:$0xff]
    %v35 = vld [vmem:[#allocation2 + $0x30] sm:$0xff]
    %v36 = vld [vmem:[#allocation2 + $0x38] sm:$0xff]
    %v37 = vld [vmem:[#allocation2 + $0x40] sm:$0xff]
    %v38 = vld [vmem:[#allocation2 + $0x48] sm:$0xff]
    %v39 = vld [vmem:[#allocation2 + $0x50] sm:$0xff]
    %v40 = vld [vmem:[#allocation2 + $0x58] sm:$0xff]
    %v41 = vld [vmem:[#allocation2 + $0x60] sm:$0xff]
    %v42 = vld [vmem:[#allocation2 + $0x68] sm:$0xff]
    %v43 = vld [vmem:[#allocation2 + $0x70] sm:$0xff]
    %v44 = vld [vmem:[#allocation2 + $0x78] sm:$0xff]
    %v45 = vld [vmem:[#allocation2 + $0x80] sm:$0xff]
    %v46 = vld [vmem:[#allocation2 + $0x88] sm:$0xff]
    %v47 = vld [vmem:[#allocation2 + $0x90] sm:$0xff]
    %v48 = vld [vmem:[#allocation2 + $0x98] sm:$0xff]
    %v49 = vld [vmem:[#allocation2 + $0xa0] sm:$0xff]
    %v50 = vld [vmem:[#allocation2 + $0xa8] sm:$0xff]
    %v51 = vld [vmem:[#allocation2 + $0xb0] sm:$0xff]
    %v52 = vld [vmem:[#allocation2 + $0xb8] sm:$0xff]
    %v53 = vld [vmem:[#allocation2 + $0xc0] sm:$0xff]
    %v54 = vld [vmem:[#allocation2 + $0xc8] sm:$0xff]
    %v55 = vld [vmem:[#allocation2 + $0xd0] sm:$0xff]
    %v56 = vld [vmem:[#allocation2 + $0xd8] sm:$0xff]
    %v57 = vld [vmem:[#allocation2 + $0xe0] sm:$0xff]
    %v58 = vld [vmem:[#allocation2 + $0xe8] sm:$0xff]
    %v59 = vld [vmem:[#allocation2 + $0xf0] sm:$0xff]
    %v60 = vld [vmem:[#allocation2 + $0xf8] sm:$0xff]
    %v61 = vld [vmem:[#allocation2 + $0x100] sm:$0xff]
    %v62 = vld [vmem:[#allocation2 + $0x108] sm:$0xff]
    %v63 = vld [vmem:[#allocation2 + $0x110] sm:$0xff]
    %v64 = vadd.f32 %v29, %v30
    %v65 = vadd.f32 %v64, %v31
    %v66 = vadd.f32 %v65, %v32
    %v67 = vadd.f32 %v66, %v33
    %v68 = vadd.f32 %v67, %v34
    %vm69 = vcmask 130048
    %v70 = vsel %vm69, %v35, 0.0
    %v71 = vadd.f32 %v68, %v70
    %72 = vadd.xlane.f32.xlu0 %v71
    %v73 = vpop.xlane.xlu0 %72
    %v74 = vadd.f32 %v36, %v37
    %v75 = vadd.f32 %v74, %v38
    %v76 = vadd.f32 %v75, %v39
    %v77 = vadd.f32 %v76, %v40
    %v78 = vadd.f32 %v77, %v41
    %v79 = vsel %vm69, %v42, 0.0
    %v80 = vadd.f32 %v78, %v79
    %81 = vadd.xlane.f32.xlu0 %v80
    %v82 = vpop.xlane.xlu0 %81
    %v83 = vadd.f32 %v43, %v44
    %v84 = vadd.f32 %v83, %v45
    %v85 = vadd.f32 %v84, %v46
    %v86 = vadd.f32 %v85, %v47
    %v87 = vadd.f32 %v86, %v48
    %v88 = vsel %vm69, %v49, 0.0
    %v89 = vadd.f32 %v87, %v88
    %90 = vadd.xlane.f32.xlu0 %v89
    %v91 = vpop.xlane.xlu0 %90
    %v92 = vadd.f32 %v50, %v51
    %v93 = vadd.f32 %v92, %v52
    %v94 = vadd.f32 %v93, %v53
    %v95 = vadd.f32 %v94, %v54
    %v96 = vadd.f32 %v95, %v55
    %v97 = vsel %vm69, %v56, 0.0
    %v98 = vadd.f32 %v96, %v97
    %99 = vadd.xlane.f32.xlu0 %v98
    %v100 = vpop.xlane.xlu0 %99
    %v101 = vadd.f32 %v57, %v58
    %v102 = vadd.f32 %v101, %v59
    %v103 = vadd.f32 %v102, %v60
    %v104 = vadd.f32 %v103, %v61
    %v105 = vadd.f32 %v104, %v62
    %v106 = vsel %vm69, %v63, 0.0
    %v107 = vadd.f32 %v105, %v106
    %108 = vadd.xlane.f32.xlu0 %v107
    %v109 = vpop.xlane.xlu0 %108
    %v110 = vadd.f32 %v73, 0.0
    %v111 = vadd.f32 %v82, 0.0
    %v112 = vadd.f32 %v91, 0.0
    %v113 = vadd.f32 %v100, 0.0
    %v114 = vadd.f32 %v109, 0.0
    %v115 = vmul.f32 %v29, %v29
    %v116 = vmul.f32 %v30, %v30
    %v117 = vmul.f32 %v31, %v31
    %v118 = vmul.f32 %v32, %v32
    %v119 = vmul.f32 %v33, %v33
    %v120 = vmul.f32 %v34, %v34
    %v121 = vmul.f32 %v35, %v35
    %v122 = vmul.f32 %v36, %v36
    %v123 = vmul.f32 %v37, %v37
    %v124 = vmul.f32 %v38, %v38
    %v125 = vmul.f32 %v39, %v39
    %v126 = vmul.f32 %v40, %v40
    %v127 = vmul.f32 %v41, %v41
    %v128 = vmul.f32 %v42, %v42
    %v129 = vmul.f32 %v43, %v43
    %v130 = vmul.f32 %v44, %v44
    %v131 = vmul.f32 %v45, %v45
    %v132 = vmul.f32 %v46, %v46
    %v133 = vmul.f32 %v47, %v47
    %v134 = vmul.f32 %v48, %v48
    %v135 = vmul.f32 %v49, %v49
    %v136 = vmul.f32 %v50, %v50
    %v137 = vmul.f32 %v51, %v51
    %v138 = vmul.f32 %v52, %v52
    %v139 = vmul.f32 %v53, %v53
    %v140 = vmul.f32 %v54, %v54
    %v141 = vmul.f32 %v55, %v55
    %v142 = vmul.f32 %v56, %v56
    %v143 = vmul.f32 %v57, %v57
    %v144 = vmul.f32 %v58, %v58
    %v145 = vmul.f32 %v59, %v59
    %v146 = vmul.f32 %v60, %v60
    %v147 = vmul.f32 %v61, %v61
    %v148 = vmul.f32 %v62, %v62
    %v149 = vmul.f32 %v63, %v63
    %v150 = vadd.f32 %v115, %v116
    %v151 = vadd.f32 %v150, %v117
    %v152 = vadd.f32 %v151, %v118
    %v153 = vadd.f32 %v152, %v119
    %v154 = vadd.f32 %v153, %v120
    %v155 = vsel %vm69, %v121, 0.0
    %v156 = vadd.f32 %v154, %v155
    %157 = vadd.xlane.f32.xlu0 %v156
    %v158 = vpop.xlane.xlu0 %157
    %v159 = vadd.f32 %v122, %v123
    %v160 = vadd.f32 %v159, %v124
    %v161 = vadd.f32 %v160, %v125
    %v162 = vadd.f32 %v161, %v126
    %v163 = vadd.f32 %v162, %v127
    %v164 = vsel %vm69, %v128, 0.0
    %v165 = vadd.f32 %v163, %v164
    %166 = vadd.xlane.f32.xlu0 %v165
    %v167 = vpop.xlane.xlu0 %166
    %v168 = vadd.f32 %v129, %v130
    %v169 = vadd.f32 %v168, %v131
    %v170 = vadd.f32 %v169, %v132
    %v171 = vadd.f32 %v170, %v133
    %v172 = vadd.f32 %v171, %v134
    %v173 = vsel %vm69, %v135, 0.0
    %v174 = vadd.f32 %v172, %v173
    %175 = vadd.xlane.f32.xlu0 %v174
    %v176 = vpop.xlane.xlu0 %175
    %v177 = vadd.f32 %v136, %v137
    %v178 = vadd.f32 %v177, %v138
    %v179 = vadd.f32 %v178, %v139
    %v180 = vadd.f32 %v179, %v140
    %v181 = vadd.f32 %v180, %v141
    %v182 = vsel %vm69, %v142, 0.0
    %v183 = vadd.f32 %v181, %v182
    %184 = vadd.xlane.f32.xlu0 %v183
    %v185 = vpop.xlane.xlu0 %184
    %v186 = vadd.f32 %v143, %v144
    %v187 = vadd.f32 %v186, %v145
    %v188 = vadd.f32 %v187, %v146
    %v189 = vadd.f32 %v188, %v147
    %v190 = vadd.f32 %v189, %v148
    %v191 = vsel %vm69, %v149, 0.0
    %v192 = vadd.f32 %v190, %v191
    %193 = vadd.xlane.f32.xlu0 %v192
    %v194 = vpop.xlane.xlu0 %193
    %v195 = vadd.f32 %v158, 0.0
    %v196 = vadd.f32 %v167, 0.0
    %v197 = vadd.f32 %v176, 0.0
    %v198 = vadd.f32 %v185, 0.0
    %v199 = vadd.f32 %v194, 0.0
    %v200 = vmul.f32 %v110, 0.0012755102
    %v201 = vmul.f32 %v111, 0.0012755102
    %v202 = vmul.f32 %v112, 0.0012755102
    %v203 = vmul.f32 %v113, 0.0012755102
    %v204 = vmul.f32 %v114, 0.0012755102
    %v205 = vmul.f32 %v195, 0.0012755102
    %v206 = vmul.f32 %v196, 0.0012755102
    %v207 = vmul.f32 %v197, 0.0012755102
    %v208 = vmul.f32 %v198, 0.0012755102
    %v209 = vmul.f32 %v199, 0.0012755102
    %v210 = vmul.f32 %v200, %v200
    %v211 = vmul.f32 %v201, %v201
    %v212 = vmul.f32 %v202, %v202
    %v213 = vmul.f32 %v203, %v203
    %v214 = vmul.f32 %v204, %v204
    %v215 = vsub.f32 %v205, %v210
    %v216 = vsub.f32 %v206, %v211
    %v217 = vsub.f32 %v207, %v212
    %v218 = vsub.f32 %v208, %v213
    %v219 = vsub.f32 %v209, %v214
    %v220 = vadd.f32 %v215, 1e-05
    %v221 = vadd.f32 %v216, 1e-05
    %v222 = vadd.f32 %v217, 1e-05
    %v223 = vadd.f32 %v218, 1e-05
    %v224 = vadd.f32 %v219, 1e-05
    %v225 = vrsqrt.pop %v220
    %v226 = vrsqrt.pop %v221
    %v227 = vrsqrt.pop %v222
    %v228 = vrsqrt.pop %v223
    %v229 = vrsqrt.pop %v224
    %v230 = vld [vmem:[%s1] sm:$0xff]
    %v231 = vld [vmem:[%s1 + $0x8] sm:$0xff]
    %v232 = vld [vmem:[%s1 + $0x10] sm:$0xff]
    %v233 = vld [vmem:[%s1 + $0x18] sm:$0xff]
    %v234 = vld [vmem:[%s1 + $0x20] sm:$0xff]
    %v235 = vmul.f32 %v225, %v230
    %v236 = vmul.f32 %v226, %v231
    %v237 = vmul.f32 %v227, %v232
    %v238 = vmul.f32 %v228, %v233
    %v239 = vmul.f32 %v229, %v234
    %v240 = vld [vmem:[%s2] sm:$0xff]
    %v241 = vld [vmem:[%s2 + $0x8] sm:$0xff]
    %v242 = vld [vmem:[%s2 + $0x10] sm:$0xff]
    %v243 = vld [vmem:[%s2 + $0x18] sm:$0xff]
    %v244 = vld [vmem:[%s2 + $0x20] sm:$0xff]
    %v245 = vmul.f32 %v200, %v235
    %v246 = vmul.f32 %v201, %v236
    %v247 = vmul.f32 %v202, %v237
    %v248 = vmul.f32 %v203, %v238
    %v249 = vmul.f32 %v204, %v239
    %v250 = vsub.f32 %v240, %v245
    %v251 = vsub.f32 %v241, %v246
    %v252 = vsub.f32 %v242, %v247
    %v253 = vsub.f32 %v243, %v248
    %v254 = vsub.f32 %v244, %v249
    %256 = vset.pattern.permute.xlu0 0
    %257 = vperm.xlu0 %256, %v235
    %v258 = vpop.permute.xlu0 %257
    %261 = vset.pattern.permute.xlu0 0
    %262 = vperm.xlu0 %261, %v236
    %v263 = vpop.permute.xlu0 %262
    %266 = vset.pattern.permute.xlu0 0
    %267 = vperm.xlu0 %266, %v237
    %v268 = vpop.permute.xlu0 %267
    %271 = vset.pattern.permute.xlu0 0
    %272 = vperm.xlu0 %271, %v238
    %v273 = vpop.permute.xlu0 %272
    %276 = vset.pattern.permute.xlu0 0
    %277 = vperm.xlu0 %276, %v239
    %v278 = vpop.permute.xlu0 %277
    %v280 = vmul.f32 %v29, %v258
    %v281 = vmul.f32 %v30, %v258
    %v282 = vmul.f32 %v31, %v258
    %v283 = vmul.f32 %v32, %v258
    %v284 = vmul.f32 %v33, %v258
    %v285 = vmul.f32 %v34, %v258
    %v286 = vmul.f32 %v35, %v258
    %v287 = vmul.f32 %v36, %v263
    %v288 = vmul.f32 %v37, %v263
    %v289 = vmul.f32 %v38, %v263
    %v290 = vmul.f32 %v39, %v263
    %v291 = vmul.f32 %v40, %v263
    %v292 = vmul.f32 %v41, %v263
    %v293 = vmul.f32 %v42, %v263
    %v294 = vmul.f32 %v43, %v268
    %v295 = vmul.f32 %v44, %v268
    %v296 = vmul.f32 %v45, %v268
    %v297 = vmul.f32 %v46, %v268
    %v298 = vmul.f32 %v47, %v268
    %v299 = vmul.f32 %v48, %v268
    %v300 = vmul.f32 %v49, %v268
    %v301 = vmul.f32 %v50, %v273
    %v302 = vmul.f32 %v51, %v273
    %v303 = vmul.f32 %v52, %v273
    %v304 = vmul.f32 %v53, %v273
    %v305 = vmul.f32 %v54, %v273
    %v306 = vmul.f32 %v55, %v273
    %v307 = vmul.f32 %v56, %v273
    %v308 = vmul.f32 %v57, %v278
    %v309 = vmul.f32 %v58, %v278
    %v310 = vmul.f32 %v59, %v278
    %v311 = vmul.f32 %v60, %v278
    %v312 = vmul.f32 %v61, %v278
    %v313 = vmul.f32 %v62, %v278
    %v314 = vmul.f32 %v63, %v278
    %316 = vset.pattern.permute.xlu0 0
    %317 = vperm.xlu0 %316, %v250
    %v318 = vpop.permute.xlu0 %317
    %321 = vset.pattern.permute.xlu0 0
    %322 = vperm.xlu0 %321, %v251
    %v323 = vpop.permute.xlu0 %322
    %326 = vset.pattern.permute.xlu0 0
    %327 = vperm.xlu0 %326, %v252
    %v328 = vpop.permute.xlu0 %327
    %331 = vset.pattern.permute.xlu0 0
    %332 = vperm.xlu0 %331, %v253
    %v333 = vpop.permute.xlu0 %332
    %336 = vset.pattern.permute.xlu0 0
    %337 = vperm.xlu0 %336, %v254
    %v338 = vpop.permute.xlu0 %337
    %v340 = vadd.f32 %v280, %v318
    %v341 = vadd.f32 %v281, %v318
    %v342 = vadd.f32 %v282, %v318
    %v343 = vadd.f32 %v283, %v318
    %v344 = vadd.f32 %v284, %v318
    %v345 = vadd.f32 %v285, %v318
    %v346 = vadd.f32 %v286, %v318
    %v347 = vadd.f32 %v287, %v323
    %v348 = vadd.f32 %v288, %v323
    %v349 = vadd.f32 %v289, %v323
    %v350 = vadd.f32 %v290, %v323
    %v351 = vadd.f32 %v291, %v323
    %v352 = vadd.f32 %v292, %v323
    %v353 = vadd.f32 %v293, %v323
    %v354 = vadd.f32 %v294, %v328
    %v355 = vadd.f32 %v295, %v328
    %v356 = vadd.f32 %v296, %v328
    %v357 = vadd.f32 %v297, %v328
    %v358 = vadd.f32 %v298, %v328
    %v359 = vadd.f32 %v299, %v328
    %v360 = vadd.f32 %v300, %v328
    %v361 = vadd.f32 %v301, %v333
    %v362 = vadd.f32 %v302, %v333
    %v363 = vadd.f32 %v303, %v333
    %v364 = vadd.f32 %v304, %v333
    %v365 = vadd.f32 %v305, %v333
    %v366 = vadd.f32 %v306, %v333
    %v367 = vadd.f32 %v307, %v333
    %v368 = vadd.f32 %v308, %v338
    %v369 = vadd.f32 %v309, %v338
    %v370 = vadd.f32 %v310, %v338
    %v371 = vadd.f32 %v311, %v338
    %v372 = vadd.f32 %v312, %v338
    %v373 = vadd.f32 %v313, %v338
    %v374 = vadd.f32 %v314, %v338
    %375 = vst [vmem:[#allocation5] sm:$0xff] %v340
    %376 = vst [vmem:[#allocation5 + $0x8] sm:$0xff] %v341
    %377 = vst [vmem:[#allocation5 + $0x10] sm:$0xff] %v342
    %378 = vst [vmem:[#allocation5 + $0x18] sm:$0xff] %v343
    %379 = vst [vmem:[#allocation5 + $0x20] sm:$0xff] %v344
    %380 = vst [vmem:[#allocation5 + $0x28] sm:$0xff] %v345
    %381 = vst.msk [vmem:[#allocation5 + $0x30] sm:$0xff] %vm69, %v346
    %382 = vst [vmem:[#allocation5 + $0x38] sm:$0xff] %v347
    %383 = vst [vmem:[#allocation5 + $0x40] sm:$0xff] %v348
    %384 = vst [vmem:[#allocation5 + $0x48] sm:$0xff] %v349
    %385 = vst [vmem:[#allocation5 + $0x50] sm:$0xff] %v350
    %386 = vst [vmem:[#allocation5 + $0x58] sm:$0xff] %v351
    %387 = vst [vmem:[#allocation5 + $0x60] sm:$0xff] %v352
    %388 = vst.msk [vmem:[#allocation5 + $0x68] sm:$0xff] %vm69, %v353
    %389 = vst [vmem:[#allocation5 + $0x70] sm:$0xff] %v354
    %390 = vst [vmem:[#allocation5 + $0x78] sm:$0xff] %v355
    %391 = vst [vmem:[#allocation5 + $0x80] sm:$0xff] %v356
    %392 = vst [vmem:[#allocation5 + $0x88] sm:$0xff] %v357
    %393 = vst [vmem:[#allocation5 + $0x90] sm:$0xff] %v358
    %394 = vst [vmem:[#allocation5 + $0x98] sm:$0xff] %v359
    %395 = vst.msk [vmem:[#allocation5 + $0xa0] sm:$0xff] %vm69, %v360
    %396 = vst [vmem:[#allocation5 + $0xa8] sm:$0xff] %v361
    %397 = vst [vmem:[#allocation5 + $0xb0] sm:$0xff] %v362
    %398 = vst [vmem:[#allocation5 + $0xb8] sm:$0xff] %v363
    %399 = vst [vmem:[#allocation5 + $0xc0] sm:$0xff] %v364
    %400 = vst [vmem:[#allocation5 + $0xc8] sm:$0xff] %v365
    %401 = vst [vmem:[#allocation5 + $0xd0] sm:$0xff] %v366
    %402 = vst.msk [vmem:[#allocation5 + $0xd8] sm:$0xff] %vm69, %v367
    %403 = vst [vmem:[#allocation5 + $0xe0] sm:$0xff] %v368
    %404 = vst [vmem:[#allocation5 + $0xe8] sm:$0xff] %v369
    %405 = vst [vmem:[#allocation5 + $0xf0] sm:$0xff] %v370
    %406 = vst [vmem:[#allocation5 + $0xf8] sm:$0xff] %v371
    %407 = vst [vmem:[#allocation5 + $0x100] sm:$0xff] %v372
    %408 = vst [vmem:[#allocation5 + $0x108] sm:$0xff] %v373
    %409 = vst.msk [vmem:[#allocation5 + $0x110] sm:$0xff] %vm69, %v374
    // Predicated region
    $region18: #{tpu_custom_call.1} parent=1 // pred_check
      _
    $region19: #{tpu_custom_call.1} parent=1 // pred_check_branch
      %411 = sbr.rel (0) target = $region21
    $region20: #{tpu_custom_call.1} parent=1 // pred_region
      %s413 = ssub.s32 4480, 4480
      %414 = vsyncadd [#allocation4], %s413
      %s415 = sshll.u32 [#allocation5], 4
      %s416 = int_to_ptr.vmem [resolvable:$true] %s415
      %421 = dma.vmem_to_hbm [thread:$0]  %s416, 4480, %s3, [#allocation4], 896, 896, 56
    $region21: #{tpu_custom_call.1} parent=1 // pred_fallthru
      _
    // Predicated region
    $region22: #{tpu_custom_call.1} parent=1 // pred_check
      _
    $region23: #{tpu_custom_call.1} parent=1 // pred_check_branch
      %423 = sbr.rel (0) target = $region25
    $region24: #{tpu_custom_call.1} parent=1 // pred_region
      %424 = dma.done [#allocation4], 4480
    $region25: #{tpu_custom_call.1} parent=1 // pred_fallthru
      _
    %425 = vsyncpa [#allocation3], 1
    %426 = vsyncpa [#allocation4], 1

</llo_original>
